<compile_context>
chip_gen: v5e
topology: v5e:2x2
jax: 0.10.0
libtpu: 0.0.40
codegen_flags: <defaults>
</compile_context>

<pallas_src>
import jax
import jax.numpy as jnp
from jax.experimental import pallas as pl
from jax.experimental.pallas import tpu as pltpu

LANE = 128
SUBLANE = 8
NUM_CLASSES = 2
N_PAD = 128  # lane-padded logits width


def _round_up(x, m):
    return (x + m - 1) // m * m


# --------------------------------------------------------------------------------------
# Kernel
# --------------------------------------------------------------------------------------
def urlcnn_kernel(x_ref,
                  w1_ref, b1_ref,
                  w2_ref, b2_ref,
                  w3_ref, b3_ref,
                  w4_ref, b4_ref,
                  o_ref):
    # fc1 (+ folded bn1) -> relu   (bf16 MXU operands, f32 accumulate + epilogue)
    h = jnp.dot(x_ref[...], w1_ref[...], preferred_element_type=jnp.float32)
    h = jnp.maximum(h + b1_ref[...], 0.0)

    # fc2 (+ folded bn2) -> relu
    h = jnp.dot(h.astype(jnp.bfloat16), w2_ref[...], preferred_element_type=jnp.float32)
    h = jnp.maximum(h + b2_ref[...], 0.0)

    # fc3 -> relu
    h = jnp.dot(h.astype(jnp.bfloat16), w3_ref[...], preferred_element_type=jnp.float32)
    h = jnp.maximum(h + b3_ref[...], 0.0)

    # fc4 (lane-padded logits, full-lane store)
    o = jnp.dot(h.astype(jnp.bfloat16), w4_ref[...], preferred_element_type=jnp.float32)
    o_ref[...] = (o + b4_ref[...]).astype(o_ref.dtype)


# --------------------------------------------------------------------------------------
# Host-side parameter preparation: fold BN, pad, cast weights to bf16
# --------------------------------------------------------------------------------------
def prepare_params(params, input_size):
    k_pad = _round_up(input_size, LANE)

    # fc1: fold bn1 into columns, pad input rows to k_pad.
    w1 = params["w1"] * params["bn1_scale"]                       # [in, 512] * [1, 512]
    b1 = params["b1"] * params["bn1_scale"] + params["bn1_shift"]
    w1p = jnp.zeros((k_pad, w1.shape[1]), jnp.float32).at[:input_size, :].set(w1)

    # fc2: fold bn2.
    w2 = params["w2"] * params["bn2_scale"]
    b2 = params["b2"] * params["bn2_scale"] + params["bn2_shift"]

    # fc4: pad 2 output columns -> 128.
    w4 = params["w4"]
    b4 = params["b4"]
    w4p = jnp.zeros((w4.shape[0], N_PAD), jnp.float32).at[:, :NUM_CLASSES].set(w4)
    b4p = jnp.zeros((1, N_PAD), jnp.float32).at[:, :NUM_CLASSES].set(b4)

    return {
        "k_pad": k_pad,
        "w1": w1p.astype(jnp.bfloat16), "b1": b1.astype(jnp.float32),
        "w2": w2.astype(jnp.bfloat16),  "b2": b2.astype(jnp.float32),
        "w3": params["w3"].astype(jnp.bfloat16), "b3": params["b3"].astype(jnp.float32),
        "w4": w4p.astype(jnp.bfloat16), "b4": b4p.astype(jnp.float32),
    }


def _pad_cast_x(x, k_pad):
    B, F = x.shape
    xp = jnp.zeros((B, k_pad), jnp.bfloat16).at[:, :F].set(x.astype(jnp.bfloat16))
    return xp


# --------------------------------------------------------------------------------------
# Wrapper
# --------------------------------------------------------------------------------------
def urlcnn_forward(x, prepared, *, tb=256):
    B = x.shape[0]
    k_pad = prepared["k_pad"]

    # Batch tile: multiple of 8 sublanes; 256 rows for the 256x256 MXU at large batch.
    tb = min(tb, _round_up(B, SUBLANE))
    b_pad = _round_up(B, tb)
    grid = (b_pad // tb,)

    xp = _pad_cast_x(x, k_pad)
    if b_pad != B:
        xp = jnp.zeros((b_pad, k_pad), jnp.bfloat16).at[:B, :].set(xp)

    weight_args = (prepared["w1"], prepared["b1"],
                   prepared["w2"], prepared["b2"],
                   prepared["w3"], prepared["b3"],
                   prepared["w4"], prepared["b4"])

    act_map = lambda i: (i, 0)     # batch-tiled activations
    const_map = lambda i: (0, 0)   # VMEM-resident weights/biases

    in_specs = [pl.BlockSpec((tb, k_pad), act_map)]
    in_specs += [pl.BlockSpec(a.shape, const_map) for a in weight_args]

    out = pl.pallas_call(
        urlcnn_kernel,
        out_shape=jax.ShapeDtypeStruct((b_pad, N_PAD), jnp.float32),
        grid=grid,
        in_specs=in_specs,
        out_specs=pl.BlockSpec((tb, N_PAD), act_map),
        compiler_params=pltpu.CompilerParams(dimension_semantics=("parallel",)),
    )(xp, *weight_args)

    return out[:B, :NUM_CLASSES]


# --------------------------------------------------------------------------------------
# Synthetic parameters + references
# --------------------------------------------------------------------------------------
def make_params(key, input_size):
    """Deterministic synthetic parameters matching URLCNN.__init__ shapes (f32)."""
    dims = [(input_size, 512), (512, 256), (256, 128), (128, NUM_CLASSES)]
    keys = jax.random.split(key, 16)
    p = {}
    ki = 0
    for li, (din, dout) in enumerate(dims, start=1):
        # PyTorch Linear weight is [out, in]; we store the transpose [in, out].
        p[f"w{li}"] = jax.random.normal(keys[ki], (din, dout), jnp.float32) * 0.05
        ki += 1
        p[f"b{li}"] = jax.random.normal(keys[ki], (1, dout), jnp.float32) * 0.05
        ki += 1

    eps = 1e-5
    for li, feat in [(1, 512), (2, 256)]:
        gamma = 1.0 + 0.1 * jax.random.normal(keys[ki], (1, feat), jnp.float32); ki += 1
        beta = 0.1 * jax.random.normal(keys[ki], (1, feat), jnp.float32); ki += 1
        mean = 0.1 * jax.random.normal(keys[ki], (1, feat), jnp.float32); ki += 1
        var = jnp.abs(1.0 + 0.1 * jax.random.normal(keys[ki], (1, feat), jnp.float32)); ki += 1
        scale = gamma / jnp.sqrt(var + eps)
        shift = beta - mean * scale
        p[f"bn{li}_scale"] = scale
        p[f"bn{li}_shift"] = shift
    return p


def reference_f32(x, p):
    """Full-f32 reference (torch-equivalent semantics, eval-mode BN)."""
    h = jnp.maximum((x @ p["w1"] + p["b1"]) * p["bn1_scale"] + p["bn1_shift"], 0.0)
    h = jnp.maximum((h @ p["w2"] + p["b2"]) * p["bn2_scale"] + p["bn2_shift"], 0.0)
    h = jnp.maximum(h @ p["w3"] + p["b3"], 0.0)
    return h @ p["w4"] + p["b4"]


def reference_prepared(x, q):
    """Reference that mirrors the kernel's bf16-operand / f32-accumulate pipeline."""
    xp = _pad_cast_x(x, q["k_pad"])
    h = jnp.maximum(jnp.dot(xp, q["w1"], preferred_element_type=jnp.float32) + q["b1"], 0.0)
    h = jnp.maximum(jnp.dot(h.astype(jnp.bfloat16), q["w2"],
                            preferred_element_type=jnp.float32) + q["b2"], 0.0)
    h = jnp.maximum(jnp.dot(h.astype(jnp.bfloat16), q["w3"],
                            preferred_element_type=jnp.float32) + q["b3"], 0.0)
    o = jnp.dot(h.astype(jnp.bfloat16), q["w4"],
                preferred_element_type=jnp.float32) + q["b4"]
    return o[:, :NUM_CLASSES]


# --------------------------------------------------------------------------------------
if __name__ == "__main__":
    key = jax.random.PRNGKey(0)
    k_x, k_p = jax.random.split(key)

    batch = 8
    input_size = 32  # consistent with nn.Linear(input_size, 512)

    x = jax.random.normal(k_x, (batch, input_size), jnp.float32)
    params = make_params(k_p, input_size)
    prepared = prepare_params(params, input_size)

    out = urlcnn_forward(x, prepared)
    out = jax.block_until_ready(out)
    assert out.shape == (batch, NUM_CLASSES)

    # Tight check vs a reference that matches the kernel's bf16/f32 numerics.
    ref_q = reference_prepared(x, prepared)
    assert jnp.allclose(out, ref_q, atol=5e-3, rtol=5e-3), "mismatch vs bf16-pipeline reference"

    # Loose semantic check vs the full-f32 torch-equivalent forward.
    ref_f = reference_f32(x, params)
    assert jnp.allclose(out, ref_f, atol=5e-2, rtol=5e-2), "mismatch vs f32 reference"

    print("KERNEL_OK")
</pallas_src>

<mosaic_0001>
module attributes {stable_mosaic.version = 11 : i64} {
  func.func @urlcnn_kernel(%arg0: i32, %arg1: memref<8x128xbf16, #tpu.memory_space<vmem>>, %arg2: memref<128x512xbf16, #tpu.memory_space<vmem>>, %arg3: memref<1x512xf32, #tpu.memory_space<vmem>>, %arg4: memref<512x256xbf16, #tpu.memory_space<vmem>>, %arg5: memref<1x256xf32, #tpu.memory_space<vmem>>, %arg6: memref<256x128xbf16, #tpu.memory_space<vmem>>, %arg7: memref<1x128xf32, #tpu.memory_space<vmem>>, %arg8: memref<128x128xbf16, #tpu.memory_space<vmem>>, %arg9: memref<1x128xf32, #tpu.memory_space<vmem>>, %arg10: memref<8x128xf32, #tpu.memory_space<vmem>>) attributes {dimension_semantics = [#tpu.dimension_semantics<parallel>], iteration_bounds = array<i64: 1>, scalar_prefetch = 0 : i64, scratch_operands = 0 : i64, tpu.core_type = #tpu.core_type<tc>, window_params = [{transform_indices = @transform_0, window_bounds = array<i64: 8, 128>}, {pipeline_mode = #tpu.pipeline_mode<synchronous>, transform_indices = @transform_1, window_bounds = array<i64: 128, 512>}, {pipeline_mode = #tpu.pipeline_mode<synchronous>, transform_indices = @transform_2, window_bounds = array<i64: 1, 512>}, {pipeline_mode = #tpu.pipeline_mode<synchronous>, transform_indices = @transform_3, window_bounds = array<i64: 512, 256>}, {pipeline_mode = #tpu.pipeline_mode<synchronous>, transform_indices = @transform_4, window_bounds = array<i64: 1, 256>}, {pipeline_mode = #tpu.pipeline_mode<synchronous>, transform_indices = @transform_5, window_bounds = array<i64: 256, 128>}, {pipeline_mode = #tpu.pipeline_mode<synchronous>, transform_indices = @transform_6, window_bounds = array<i64: 1, 128>}, {pipeline_mode = #tpu.pipeline_mode<synchronous>, transform_indices = @transform_7, window_bounds = array<i64: 128, 128>}, {pipeline_mode = #tpu.pipeline_mode<synchronous>, transform_indices = @transform_8, window_bounds = array<i64: 1, 128>}, {transform_indices = @transform_9, window_bounds = array<i64: 8, 128>}]} {
    %c0 = arith.constant 0 : index
    %c0_0 = arith.constant 0 : index
    %0 = vector.load %arg1[%c0, %c0_0] : memref<8x128xbf16, #tpu.memory_space<vmem>>, vector<8x128xbf16>
    %c0_1 = arith.constant 0 : index
    %c0_2 = arith.constant 0 : index
    %1 = vector.load %arg2[%c0_1, %c0_2] : memref<128x512xbf16, #tpu.memory_space<vmem>>, vector<128x512xbf16>
    %cst = arith.constant dense<0.000000e+00> : vector<8x512xf32>
    %2 = tpu.matmul %0, %1, %cst {dimension_numbers = #tpu.dot_dimension_numbers<[1], [0], [0], [1], [0, 0, 1, 1], [], []>} : vector<8x128xbf16>, vector<128x512xbf16>, vector<8x512xf32> -> vector<8x512xf32>
    %c0_3 = arith.constant 0 : index
    %c0_4 = arith.constant 0 : index
    %3 = vector.load %arg3[%c0_3, %c0_4] : memref<1x512xf32, #tpu.memory_space<vmem>>, vector<1x512xf32>
    %4 = vector.broadcast %3 : vector<1x512xf32> to vector<8x512xf32>
    %5 = arith.addf %2, %4 : vector<8x512xf32>
    %cst_5 = arith.constant 0.000000e+00 : f32
    %6 = vector.broadcast %cst_5 : f32 to vector<8x512xf32>
    %7 = arith.maximumf %5, %6 : vector<8x512xf32>
    %8 = arith.truncf %7 : vector<8x512xf32> to vector<8x512xbf16>
    %c0_6 = arith.constant 0 : index
    %c0_7 = arith.constant 0 : index
    %9 = vector.load %arg4[%c0_6, %c0_7] : memref<512x256xbf16, #tpu.memory_space<vmem>>, vector<512x256xbf16>
    %cst_8 = arith.constant dense<0.000000e+00> : vector<8x256xf32>
    %10 = tpu.matmul %8, %9, %cst_8 {dimension_numbers = #tpu.dot_dimension_numbers<[1], [0], [0], [1], [0, 0, 1, 1], [], []>} : vector<8x512xbf16>, vector<512x256xbf16>, vector<8x256xf32> -> vector<8x256xf32>
    %c0_9 = arith.constant 0 : index
    %c0_10 = arith.constant 0 : index
    %11 = vector.load %arg5[%c0_9, %c0_10] : memref<1x256xf32, #tpu.memory_space<vmem>>, vector<1x256xf32>
    %12 = vector.broadcast %11 : vector<1x256xf32> to vector<8x256xf32>
    %13 = arith.addf %10, %12 : vector<8x256xf32>
    %cst_11 = arith.constant 0.000000e+00 : f32
    %14 = vector.broadcast %cst_11 : f32 to vector<8x256xf32>
    %15 = arith.maximumf %13, %14 : vector<8x256xf32>
    %16 = arith.truncf %15 : vector<8x256xf32> to vector<8x256xbf16>
    %c0_12 = arith.constant 0 : index
    %c0_13 = arith.constant 0 : index
    %17 = vector.load %arg6[%c0_12, %c0_13] : memref<256x128xbf16, #tpu.memory_space<vmem>>, vector<256x128xbf16>
    %cst_14 = arith.constant dense<0.000000e+00> : vector<8x128xf32>
    %18 = tpu.matmul %16, %17, %cst_14 {dimension_numbers = #tpu.dot_dimension_numbers<[1], [0], [0], [1], [0, 0, 1, 1], [], []>} : vector<8x256xbf16>, vector<256x128xbf16>, vector<8x128xf32> -> vector<8x128xf32>
    %c0_15 = arith.constant 0 : index
    %c0_16 = arith.constant 0 : index
    %19 = vector.load %arg7[%c0_15, %c0_16] : memref<1x128xf32, #tpu.memory_space<vmem>>, vector<1x128xf32>
    %20 = vector.broadcast %19 : vector<1x128xf32> to vector<8x128xf32>
    %21 = arith.addf %18, %20 : vector<8x128xf32>
    %cst_17 = arith.constant 0.000000e+00 : f32
    %22 = vector.broadcast %cst_17 : f32 to vector<8x128xf32>
    %23 = arith.maximumf %21, %22 : vector<8x128xf32>
    %24 = arith.truncf %23 : vector<8x128xf32> to vector<8x128xbf16>
    %c0_18 = arith.constant 0 : index
    %c0_19 = arith.constant 0 : index
    %25 = vector.load %arg8[%c0_18, %c0_19] : memref<128x128xbf16, #tpu.memory_space<vmem>>, vector<128x128xbf16>
    %cst_20 = arith.constant dense<0.000000e+00> : vector<8x128xf32>
    %26 = tpu.matmul %24, %25, %cst_20 {dimension_numbers = #tpu.dot_dimension_numbers<[1], [0], [0], [1], [0, 0, 1, 1], [], []>} : vector<8x128xbf16>, vector<128x128xbf16>, vector<8x128xf32> -> vector<8x128xf32>
    %c0_21 = arith.constant 0 : index
    %c0_22 = arith.constant 0 : index
    %27 = vector.load %arg9[%c0_21, %c0_22] : memref<1x128xf32, #tpu.memory_space<vmem>>, vector<1x128xf32>
    %28 = vector.broadcast %27 : vector<1x128xf32> to vector<8x128xf32>
    %29 = arith.addf %26, %28 : vector<8x128xf32>
    %c0_23 = arith.constant 0 : index
    %c0_24 = arith.constant 0 : index
    %30 = vector.load %arg10[%c0_23, %c0_24] : memref<8x128xf32, #tpu.memory_space<vmem>>, vector<8x128xf32>
    tpu.vector_store %arg10[%c0_23, %c0_24], %29 {strides = array<i32>} : memref<8x128xf32, #tpu.memory_space<vmem>>, vector<8x128xf32>,
    return
  }
  func.func @transform_0(%arg0: i32) -> (i32, i32) {
    %c0_i32 = arith.constant 0 : i32
    %c0_i32_0 = arith.constant 0 : i32
    return %arg0, %c0_i32 : i32, i32
  }
  func.func @transform_1(%arg0: i32) -> (i32, i32) {
    %c0_i32 = arith.constant 0 : i32
    %c0_i32_0 = arith.constant 0 : i32
    %c0_i32_1 = arith.constant 0 : i32
    return %c0_i32, %c0_i32_0 : i32, i32
  }
  func.func @transform_2(%arg0: i32) -> (i32, i32) {
    %c0_i32 = arith.constant 0 : i32
    %c0_i32_0 = arith.constant 0 : i32
    %c0_i32_1 = arith.constant 0 : i32
    return %c0_i32, %c0_i32_0 : i32, i32
  }
  func.func @transform_3(%arg0: i32) -> (i32, i32) {
    %c0_i32 = arith.constant 0 : i32
    %c0_i32_0 = arith.constant 0 : i32
    %c0_i32_1 = arith.constant 0 : i32
    return %c0_i32, %c0_i32_0 : i32, i32
  }
  func.func @transform_4(%arg0: i32) -> (i32, i32) {
    %c0_i32 = arith.constant 0 : i32
    %c0_i32_0 = arith.constant 0 : i32
    %c0_i32_1 = arith.constant 0 : i32
    return %c0_i32, %c0_i32_0 : i32, i32
  }
  func.func @transform_5(%arg0: i32) -> (i32, i32) {
    %c0_i32 = arith.constant 0 : i32
    %c0_i32_0 = arith.constant 0 : i32
    %c0_i32_1 = arith.constant 0 : i32
    return %c0_i32, %c0_i32_0 : i32, i32
  }
  func.func @transform_6(%arg0: i32) -> (i32, i32) {
    %c0_i32 = arith.constant 0 : i32
    %c0_i32_0 = arith.constant 0 : i32
    %c0_i32_1 = arith.constant 0 : i32
    return %c0_i32, %c0_i32_0 : i32, i32
  }
  func.func @transform_7(%arg0: i32) -> (i32, i32) {
    %c0_i32 = arith.constant 0 : i32
    %c0_i32_0 = arith.constant 0 : i32
    %c0_i32_1 = arith.constant 0 : i32
    return %c0_i32, %c0_i32_0 : i32, i32
  }
  func.func @transform_8(%arg0: i32) -> (i32, i32) {
    %c0_i32 = arith.constant 0 : i32
    %c0_i32_0 = arith.constant 0 : i32
    %c0_i32_1 = arith.constant 0 : i32
    return %c0_i32, %c0_i32_0 : i32, i32
  }
  func.func @transform_9(%arg0: i32) -> (i32, i32) {
    %c0_i32 = arith.constant 0 : i32
    %c0_i32_0 = arith.constant 0 : i32
    return %arg0, %c0_i32 : i32, i32
  }
}

</mosaic_0001>

<llo_original>
// kernel: tpu_custom_call.1
$region0: #{tpu_custom_call.1}
  #allocation0 [shape = 'u32[]', space=smem, size = 0x4, offset = 0x4, fixed_abs, tag = 'smem constant byte address 0x4 - core index']
  #allocation1 [shape = 'u32[72,128]{1,0:T(1,128)}', space=vmem, size = 0x9000, scoped, tag = 'internal scratch']
  %s0 = inlined_call_operand.hbm [shape: bf16[8,128], index: 0, kind: input, shape index: {}]
  %s1 = inlined_call_operand.hbm [shape: bf16[128,512], index: 1, kind: input, shape index: {}]
  %s2 = inlined_call_operand.hbm [shape: f32[1,512], index: 2, kind: input, shape index: {}]
  %s3 = inlined_call_operand.hbm [shape: bf16[512,256], index: 3, kind: input, shape index: {}]
  %s4 = inlined_call_operand.vmem [shape: f32[1,256], index: 4, kind: input, shape index: {}]
  %s5 = inlined_call_operand.hbm [shape: bf16[256,128], index: 5, kind: input, shape index: {}]
  %s6 = inlined_call_operand.vmem [shape: f32[1,128], index: 6, kind: input, shape index: {}]
  %s7 = inlined_call_operand.hbm [shape: bf16[128,128], index: 7, kind: input, shape index: {}]
  %s8 = inlined_call_operand.vmem [shape: f32[1,128], index: 8, kind: input, shape index: {}]
  %s9 = inlined_call_operand.hbm [shape: f32[8,128], index: 9, kind: output, shape index: {}]
  %s10 = sld [smem:[#allocation0]]
  $region70: #{tpu_custom_call.1} parent=0
    _
  %s12 = ssub.s32 1, %s10
  %s13 = scalar_select 0, %s12, %s10
  $region1: #{tpu_custom_call.1} parent=0
    #allocation2 [shape = 'u8[2048]{0}', space=vmem, size = 0x800, scoped, tag = 'input window, operand 0, single buffered']
    #allocation3 [shape = 's32[1]{0}', space=sflag, size = 0x4, scoped, tag = 'scoped memory for tpu_custom_call.1']
    #allocation4 [shape = 's32[1]{0}', space=sflag, size = 0x4, scoped, tag = 'scoped memory for tpu_custom_call.1']
    #allocation5 [shape = 'u8[131072]{0}', space=vmem, size = 0x20000, scoped, tag = 'input window, operand 1, single buffered']
    #allocation6 [shape = 's32[1]{0}', space=sflag, size = 0x4, scoped, tag = 'scoped memory for tpu_custom_call.1']
    #allocation7 [shape = 'u8[2048]{0}', space=vmem, size = 0x800, scoped, tag = 'input window, operand 2, single buffered']
    #allocation8 [shape = 'u8[262144]{0}', space=vmem, size = 0x40000, scoped, tag = 'input window, operand 3, single buffered']
    #allocation9 [shape = 's32[1]{0}', space=sflag, size = 0x4, scoped, tag = 'scoped memory for tpu_custom_call.1']
    #allocation10 [shape = 'u8[65536]{0}', space=vmem, size = 0x10000, scoped, tag = 'input window, operand 5, single buffered']
    #allocation11 [shape = 'u8[32768]{0}', space=vmem, size = 0x8000, scoped, tag = 'input window, operand 7, single buffered']
    #allocation12 [shape = 's32[1]{0}', space=sflag, size = 0x4, scoped, tag = 'scoped memory for tpu_custom_call.1']
    #allocation13 [shape = 'u8[4096]{0}', space=vmem, size = 0x1000, scoped, tag = 'output window, operand 0, single buffered']
    %14 = vsyncpa [#allocation3], 0
    %15 = vsyncpa [#allocation6], 0
    %16 = vsyncpa [#allocation9], 0
    %17 = vsyncpa [#allocation12], 0
    %18 = vsyncpa [#allocation4], 0
    // Predicated region
    $region2: #{tpu_custom_call.1} parent=1 // pred_check
      _
    $region3: #{tpu_custom_call.1} parent=1 // pred_check_branch
      %20 = sbr.rel (0) target = $region5
    $region4: #{tpu_custom_call.1} parent=1 // pred_region
      %22 = vsyncadd [#allocation3], 0
      %s24 = sshll.u32 %s0, 4
      %s25 = int_to_ptr.hbm [resolvable:$true] %s24
      %s26 = sshll.u32 [#allocation2], 4
      %s27 = int_to_ptr.vmem [resolvable:$true] %s26
      %29 = dma.hbm_to_vmem [thread:$0]  %s25, 64, %s27, [#allocation3]
    $region5: #{tpu_custom_call.1} parent=1 // pred_fallthru
      _
    // Predicated region
    $region6: #{tpu_custom_call.1} parent=1 // pred_check
      _
    $region7: #{tpu_custom_call.1} parent=1 // pred_check_branch
      %31 = sbr.rel (0) target = $region9
    $region8: #{tpu_custom_call.1} parent=1 // pred_region
      %33 = vsyncadd [#allocation6], 0
      %s34 = sshll.u32 %s1, 4
      %s35 = int_to_ptr.hbm [resolvable:$true] %s34
      %s36 = sshll.u32 [#allocation5], 4
      %s37 = int_to_ptr.vmem [resolvable:$true] %s36
      %42 = dma.hbm_to_vmem [thread:$0]  %s35, 4096, %s37, [#allocation6], 256, 256, 16
    $region9: #{tpu_custom_call.1} parent=1 // pred_fallthru
      _
    // Predicated region
    $region10: #{tpu_custom_call.1} parent=1 // pred_check
      _
    $region11: #{tpu_custom_call.1} parent=1 // pred_check_branch
      %44 = sbr.rel (0) target = $region13
    $region12: #{tpu_custom_call.1} parent=1 // pred_region
      %46 = vsyncadd [#allocation6], 0
      %s48 = sshll.u32 %s2, 4
      %s49 = int_to_ptr.hbm [resolvable:$true] %s48
      %s50 = sshll.u32 [#allocation7], 4
      %s51 = int_to_ptr.vmem [resolvable:$true] %s50
      %53 = dma.hbm_to_vmem [thread:$0]  %s49, 64, %s51, [#allocation6]
    $region13: #{tpu_custom_call.1} parent=1 // pred_fallthru
      _
    // Predicated region
    $region14: #{tpu_custom_call.1} parent=1 // pred_check
      _
    $region15: #{tpu_custom_call.1} parent=1 // pred_check_branch
      %55 = sbr.rel (0) target = $region17
    $region16: #{tpu_custom_call.1} parent=1 // pred_region
      %57 = vsyncadd [#allocation9], 0
      %s58 = sshll.u32 %s3, 4
      %s59 = int_to_ptr.hbm [resolvable:$true] %s58
      %s60 = sshll.u32 [#allocation8], 4
      %s61 = int_to_ptr.vmem [resolvable:$true] %s60
      %66 = dma.hbm_to_vmem [thread:$0]  %s59, 8192, %s61, [#allocation9], 128, 128, 8
    $region17: #{tpu_custom_call.1} parent=1 // pred_fallthru
      _
    // Predicated region
    $region18: #{tpu_custom_call.1} parent=1 // pred_check
      _
    $region19: #{tpu_custom_call.1} parent=1 // pred_check_branch
      %68 = sbr.rel (0) target = $region21
    $region20: #{tpu_custom_call.1} parent=1 // pred_region
      _
    $region21: #{tpu_custom_call.1} parent=1 // pred_fallthru
      _
    // Predicated region
    $region22: #{tpu_custom_call.1} parent=1 // pred_check
      _
    $region23: #{tpu_custom_call.1} parent=1 // pred_check_branch
      %70 = sbr.rel (0) target = $region25
    $region24: #{tpu_custom_call.1} parent=1 // pred_region
      %72 = vsyncadd [#allocation9], 0
      %s73 = sshll.u32 %s5, 4
      %s74 = int_to_ptr.hbm [resolvable:$true] %s73
      %s75 = sshll.u32 [#allocation10], 4
      %s76 = int_to_ptr.vmem [resolvable:$true] %s75
      %81 = dma.hbm_to_vmem [thread:$0]  %s74, 2048, %s76, [#allocation9], 64, 64, 4
    $region25: #{tpu_custom_call.1} parent=1 // pred_fallthru
      _
    // Predicated region
    $region26: #{tpu_custom_call.1} parent=1 // pred_check
      _
    $region27: #{tpu_custom_call.1} parent=1 // pred_check_branch
      %83 = sbr.rel (0) target = $region29
    $region28: #{tpu_custom_call.1} parent=1 // pred_region
      _
    $region29: #{tpu_custom_call.1} parent=1 // pred_fallthru
      _
    // Predicated region
    $region30: #{tpu_custom_call.1} parent=1 // pred_check
      _
    $region31: #{tpu_custom_call.1} parent=1 // pred_check_branch
      %85 = sbr.rel (0) target = $region33
    $region32: #{tpu_custom_call.1} parent=1 // pred_region
      %87 = vsyncadd [#allocation12], 0
      %s88 = sshll.u32 %s7, 4
      %s89 = int_to_ptr.hbm [resolvable:$true] %s88
      %s90 = sshll.u32 [#allocation11], 4
      %s91 = int_to_ptr.vmem [resolvable:$true] %s90
      %96 = dma.hbm_to_vmem [thread:$0]  %s89, 1024, %s91, [#allocation12], 64, 64, 4
    $region33: #{tpu_custom_call.1} parent=1 // pred_fallthru
      _
    // Predicated region
    $region34: #{tpu_custom_call.1} parent=1 // pred_check
      _
    $region35: #{tpu_custom_call.1} parent=1 // pred_check_branch
      %98 = sbr.rel (0) target = $region37
    $region36: #{tpu_custom_call.1} parent=1 // pred_region
      _
    $region37: #{tpu_custom_call.1} parent=1 // pred_fallthru
      _
    // Predicated region
    $region38: #{tpu_custom_call.1} parent=1 // pred_check
      _
    $region39: #{tpu_custom_call.1} parent=1 // pred_check_branch
      %100 = sbr.rel (0) target = $region41
    $region40: #{tpu_custom_call.1} parent=1 // pred_region
      %102 = dma.done [#allocation3], 64
    $region41: #{tpu_custom_call.1} parent=1 // pred_fallthru
      _
    // Predicated region
    $region42: #{tpu_custom_call.1} parent=1 // pred_check
      _
    $region43: #{tpu_custom_call.1} parent=1 // pred_check_branch
      %104 = sbr.rel (0) target = $region45
    $region44: #{tpu_custom_call.1} parent=1 // pred_region
      %106 = dma.done [#allocation6], 4096
    $region45: #{tpu_custom_call.1} parent=1 // pred_fallthru
      _
    // Predicated region
    $region46: #{tpu_custom_call.1} parent=1 // pred_check
      _
    $region47: #{tpu_custom_call.1} parent=1 // pred_check_branch
      %108 = sbr.rel (0) target = $region49
    $region48: #{tpu_custom_call.1} parent=1 // pred_region
      %110 = dma.done [#allocation6], 64
    $region49: #{tpu_custom_call.1} parent=1 // pred_fallthru
      _
    // Predicated region
    $region50: #{tpu_custom_call.1} parent=1 // pred_check
      _
    $region51: #{tpu_custom_call.1} parent=1 // pred_check_branch
      %112 = sbr.rel (0) target = $region53
    $region52: #{tpu_custom_call.1} parent=1 // pred_region
      %114 = dma.done [#allocation9], 8192
    $region53: #{tpu_custom_call.1} parent=1 // pred_fallthru
      _
    // Predicated region
    $region54: #{tpu_custom_call.1} parent=1 // pred_check
      _
    $region55: #{tpu_custom_call.1} parent=1 // pred_check_branch
      %116 = sbr.rel (0) target = $region57
    $region56: #{tpu_custom_call.1} parent=1 // pred_region
      %118 = dma.done [#allocation9], 2048
    $region57: #{tpu_custom_call.1} parent=1 // pred_fallthru
      _
    // Predicated region
    $region58: #{tpu_custom_call.1} parent=1 // pred_check
      _
    $region59: #{tpu_custom_call.1} parent=1 // pred_check_branch
      %120 = sbr.rel (0) target = $region61
    $region60: #{tpu_custom_call.1} parent=1 // pred_region
      %122 = dma.done [#allocation12], 1024
    $region61: #{tpu_custom_call.1} parent=1 // pred_fallthru
      _
    %v123 = vld [vmem:[#allocation2] sm:$0xf]
    %v124 = vld [vmem:[#allocation5] sm:$0xff]
    %v125 = vld [vmem:[#allocation5 + $0x8] sm:$0xff]
    %v126 = vld [vmem:[#allocation5 + $0x10] sm:$0xff]
    %v127 = vld [vmem:[#allocation5 + $0x18] sm:$0xff]
    %v128 = vld [vmem:[#allocation5 + $0x20] sm:$0xff]
    %v129 = vld [vmem:[#allocation5 + $0x28] sm:$0xff]
    %v130 = vld [vmem:[#allocation5 + $0x30] sm:$0xff]
    %v131 = vld [vmem:[#allocation5 + $0x38] sm:$0xff]
    %v132 = vld [vmem:[#allocation5 + $0x40] sm:$0xff]
    %v133 = vld [vmem:[#allocation5 + $0x48] sm:$0xff]
    %v134 = vld [vmem:[#allocation5 + $0x50] sm:$0xff]
    %v135 = vld [vmem:[#allocation5 + $0x58] sm:$0xff]
    %v136 = vld [vmem:[#allocation5 + $0x60] sm:$0xff]
    %v137 = vld [vmem:[#allocation5 + $0x68] sm:$0xff]
    %v138 = vld [vmem:[#allocation5 + $0x70] sm:$0xff]
    %v139 = vld [vmem:[#allocation5 + $0x78] sm:$0xff]
    %v140 = vld [vmem:[#allocation5 + $0x80] sm:$0xff]
    %v141 = vld [vmem:[#allocation5 + $0x88] sm:$0xff]
    %v142 = vld [vmem:[#allocation5 + $0x90] sm:$0xff]
    %v143 = vld [vmem:[#allocation5 + $0x98] sm:$0xff]
    %v144 = vld [vmem:[#allocation5 + $0xa0] sm:$0xff]
    %v145 = vld [vmem:[#allocation5 + $0xa8] sm:$0xff]
    %v146 = vld [vmem:[#allocation5 + $0xb0] sm:$0xff]
    %v147 = vld [vmem:[#allocation5 + $0xb8] sm:$0xff]
    %v148 = vld [vmem:[#allocation5 + $0xc0] sm:$0xff]
    %v149 = vld [vmem:[#allocation5 + $0xc8] sm:$0xff]
    %v150 = vld [vmem:[#allocation5 + $0xd0] sm:$0xff]
    %v151 = vld [vmem:[#allocation5 + $0xd8] sm:$0xff]
    %v152 = vld [vmem:[#allocation5 + $0xe0] sm:$0xff]
    %v153 = vld [vmem:[#allocation5 + $0xe8] sm:$0xff]
    %v154 = vld [vmem:[#allocation5 + $0xf0] sm:$0xff]
    %v155 = vld [vmem:[#allocation5 + $0xf8] sm:$0xff]
    %v156 = vld [vmem:[#allocation7] sm:$0xf]
    %v158 = vperm.slane %v156, 0
    %v159 = vperm.slane %v156, 1
    %v160 = vperm.slane %v156, 2
    %v161 = vperm.slane %v156, 3
    %v198 = vunpack.c.l.b16 %v124
    %v199 = vunpack.c.h.b16 %v124
    %v200 = vunpack.c.l.b16 %v125
    %v201 = vunpack.c.h.b16 %v125
    %v202 = vunpack.c.l.b16 %v126
    %v203 = vunpack.c.h.b16 %v126
    %v204 = vunpack.c.l.b16 %v127
    %v205 = vunpack.c.h.b16 %v127
    %v206 = vunpack.c.l.b16 %v128
    %v207 = vunpack.c.h.b16 %v128
    %v208 = vunpack.c.l.b16 %v129
    %v209 = vunpack.c.h.b16 %v129
    %v210 = vunpack.c.l.b16 %v130
    %v211 = vunpack.c.h.b16 %v130
    %v212 = vunpack.c.l.b16 %v131
    %v213 = vunpack.c.h.b16 %v131
    %v214 = vunpack.c.l.b16 %v132
    %v215 = vunpack.c.h.b16 %v132
    %v216 = vunpack.c.l.b16 %v133
    %v217 = vunpack.c.h.b16 %v133
    %v218 = vunpack.c.l.b16 %v134
    %v219 = vunpack.c.h.b16 %v134
    %v220 = vunpack.c.l.b16 %v135
    %v221 = vunpack.c.h.b16 %v135
    %v222 = vunpack.c.l.b16 %v136
    %v223 = vunpack.c.h.b16 %v136
    %v224 = vunpack.c.l.b16 %v137
    %v225 = vunpack.c.h.b16 %v137
    %v226 = vunpack.c.l.b16 %v138
    %v227 = vunpack.c.h.b16 %v138
    %v228 = vunpack.c.l.b16 %v139
    %v229 = vunpack.c.h.b16 %v139
    %v230 = vunpack.c.l.b16 %v140
    %v231 = vunpack.c.h.b16 %v140
    %v232 = vunpack.c.l.b16 %v141
    %v233 = vunpack.c.h.b16 %v141
    %v234 = vunpack.c.l.b16 %v142
    %v235 = vunpack.c.h.b16 %v142
    %v236 = vunpack.c.l.b16 %v143
    %v237 = vunpack.c.h.b16 %v143
    %v238 = vunpack.c.l.b16 %v144
    %v239 = vunpack.c.h.b16 %v144
    %v240 = vunpack.c.l.b16 %v145
    %v241 = vunpack.c.h.b16 %v145
    %v242 = vunpack.c.l.b16 %v146
    %v243 = vunpack.c.h.b16 %v146
    %v244 = vunpack.c.l.b16 %v147
    %v245 = vunpack.c.h.b16 %v147
    %v246 = vunpack.c.l.b16 %v148
    %v247 = vunpack.c.h.b16 %v148
    %v248 = vunpack.c.l.b16 %v149
    %v249 = vunpack.c.h.b16 %v149
    %v250 = vunpack.c.l.b16 %v150
    %v251 = vunpack.c.h.b16 %v150
    %v252 = vunpack.c.l.b16 %v151
    %v253 = vunpack.c.h.b16 %v151
    %v254 = vunpack.c.l.b16 %v152
    %v255 = vunpack.c.h.b16 %v152
    %v256 = vunpack.c.l.b16 %v153
    %v257 = vunpack.c.h.b16 %v153
    %v258 = vunpack.c.l.b16 %v154
    %v259 = vunpack.c.h.b16 %v154
    %v260 = vunpack.c.l.b16 %v155
    %v261 = vunpack.c.h.b16 %v155
    %v262 = vpack.c.b16 %v202, %v198
    %v263 = vpack.c.b16 %v203, %v199
    %v264 = vpack.c.b16 %v204, %v200
    %v265 = vpack.c.b16 %v205, %v201
    %v266 = vpack.c.b16 %v210, %v206
    %v267 = vpack.c.b16 %v211, %v207
    %v268 = vpack.c.b16 %v212, %v208
    %v269 = vpack.c.b16 %v213, %v209
    %v270 = vpack.c.b16 %v218, %v214
    %v271 = vpack.c.b16 %v219, %v215
    %v272 = vpack.c.b16 %v220, %v216
    %v273 = vpack.c.b16 %v221, %v217
    %v274 = vpack.c.b16 %v226, %v222
    %v275 = vpack.c.b16 %v227, %v223
    %v276 = vpack.c.b16 %v228, %v224
    %v277 = vpack.c.b16 %v229, %v225
    %v278 = vpack.c.b16 %v234, %v230
    %v279 = vpack.c.b16 %v235, %v231
    %v280 = vpack.c.b16 %v236, %v232
    %v281 = vpack.c.b16 %v237, %v233
    %v282 = vpack.c.b16 %v242, %v238
    %v283 = vpack.c.b16 %v243, %v239
    %v284 = vpack.c.b16 %v244, %v240
    %v285 = vpack.c.b16 %v245, %v241
    %v286 = vpack.c.b16 %v250, %v246
    %v287 = vpack.c.b16 %v251, %v247
    %v288 = vpack.c.b16 %v252, %v248
    %v289 = vpack.c.b16 %v253, %v249
    %v290 = vpack.c.b16 %v258, %v254
    %v291 = vpack.c.b16 %v259, %v255
    %v292 = vpack.c.b16 %v260, %v256
    %v293 = vpack.c.b16 %v261, %v257
    %326 = vmatpush.bf16.msra.mxu0 %v290
    %327 = vmatpush.bf16.msra.mxu0 %v286
    %328 = vmatpush.bf16.msra.mxu0 %v282
    %329 = vmatpush.bf16.msra.mxu0 %v278
    %330 = vmatpush.bf16.msra.mxu0 %v274
    %331 = vmatpush.bf16.msra.mxu0 %v270
    %332 = vmatpush.bf16.msra.mxu0 %v266
    %333 = vmatpush.bf16.msra.mxu0 %v262
    %334 = vmatmul.bf16.gmra.mxu0 %v123
    %v335 = vpop.f32.mrf.mxu0
    %v336 = vadd.f32 %v158, %v335
    %v337 = vpop.f32.mrf.mxu0
    %338 = vdwg.mxu0
    %339 = vmatpush.bf16.msra.mxu0 %v291
    %340 = vmatpush.bf16.msra.mxu0 %v287
    %341 = vmatpush.bf16.msra.mxu0 %v283
    %342 = vmatpush.bf16.msra.mxu0 %v279
    %343 = vmatpush.bf16.msra.mxu0 %v275
    %344 = vmatpush.bf16.msra.mxu0 %v271
    %345 = vmatpush.bf16.msra.mxu0 %v267
    %346 = vmatpush.bf16.msra.mxu0 %v263
    %347 = vmatmul.bf16.gmra.mxu0 %v123
    %v348 = vpop.f32.mrf.mxu0
    %v349 = vadd.f32 %v159, %v348
    %v350 = vpop.f32.mrf.mxu0
    %351 = vdwg.mxu0
    %352 = vmatpush.bf16.msra.mxu0 %v292
    %353 = vmatpush.bf16.msra.mxu0 %v288
    %354 = vmatpush.bf16.msra.mxu0 %v284
    %355 = vmatpush.bf16.msra.mxu0 %v280
    %356 = vmatpush.bf16.msra.mxu0 %v276
    %357 = vmatpush.bf16.msra.mxu0 %v272
    %358 = vmatpush.bf16.msra.mxu0 %v268
    %359 = vmatpush.bf16.msra.mxu0 %v264
    %360 = vmatmul.bf16.gmra.mxu0 %v123
    %v361 = vpop.f32.mrf.mxu0
    %v362 = vadd.f32 %v160, %v361
    %v363 = vpop.f32.mrf.mxu0
    %364 = vdwg.mxu0
    %365 = vmatpush.bf16.msra.mxu0 %v293
    %366 = vmatpush.bf16.msra.mxu0 %v289
    %367 = vmatpush.bf16.msra.mxu0 %v285
    %368 = vmatpush.bf16.msra.mxu0 %v281
    %369 = vmatpush.bf16.msra.mxu0 %v277
    %370 = vmatpush.bf16.msra.mxu0 %v273
    %371 = vmatpush.bf16.msra.mxu0 %v269
    %372 = vmatpush.bf16.msra.mxu0 %v265
    %373 = vmatmul.bf16.gmra.mxu0 %v123
    %v374 = vpop.f32.mrf.mxu0
    %v375 = vadd.f32 %v161, %v374
    %v376 = vpop.f32.mrf.mxu0
    %377 = vdwg.mxu0
    %v378 = vmax.f32 %v336, 0.0
    %v379 = vmax.f32 %v349, 0.0
    %v380 = vmax.f32 %v362, 0.0
    %v381 = vmax.f32 %v375, 0.0
    %v382 = vpack.c.bf16 %v378, %v378
    %v383 = vpack.c.bf16 %v379, %v379
    %v384 = vpack.c.bf16 %v380, %v380
    %v385 = vpack.c.bf16 %v381, %v381
    %v386 = vld [vmem:[#allocation8] sm:$0xff]
    %v387 = vld [vmem:[#allocation8 + $0x8] sm:$0xff]
    %v388 = vld [vmem:[#allocation8 + $0x10] sm:$0xff]
    %v389 = vld [vmem:[#allocation8 + $0x18] sm:$0xff]
    %v390 = vld [vmem:[#allocation8 + $0x20] sm:$0xff]
    %v391 = vld [vmem:[#allocation8 + $0x28] sm:$0xff]
    %v392 = vld [vmem:[#allocation8 + $0x30] sm:$0xff]
    %v393 = vld [vmem:[#allocation8 + $0x38] sm:$0xff]
    %v394 = vld [vmem:[#allocation8 + $0x40] sm:$0xff]
    %v395 = vld [vmem:[#allocation8 + $0x48] sm:$0xff]
    %v396 = vld [vmem:[#allocation8 + $0x50] sm:$0xff]
    %v397 = vld [vmem:[#allocation8 + $0x58] sm:$0xff]
    %v398 = vld [vmem:[#allocation8 + $0x60] sm:$0xff]
    %v399 = vld [vmem:[#allocation8 + $0x68] sm:$0xff]
    %v400 = vld [vmem:[#allocation8 + $0x70] sm:$0xff]
    %v401 = vld [vmem:[#allocation8 + $0x78] sm:$0xff]
    %v402 = vld [vmem:[#allocation8 + $0x80] sm:$0xff]
    %v403 = vld [vmem:[#allocation8 + $0x88] sm:$0xff]
    %v404 = vld [vmem:[#allocation8 + $0x90] sm:$0xff]
    %v405 = vld [vmem:[#allocation8 + $0x98] sm:$0xff]
    %v406 = vld [vmem:[#allocation8 + $0xa0] sm:$0xff]
    %v407 = vld [vmem:[#allocation8 + $0xa8] sm:$0xff]
    %v408 = vld [vmem:[#allocation8 + $0xb0] sm:$0xff]
    %v409 = vld [vmem:[#allocation8 + $0xb8] sm:$0xff]
    %v410 = vld [vmem:[#allocation8 + $0xc0] sm:$0xff]
    %v411 = vld [vmem:[#allocation8 + $0xc8] sm:$0xff]
    %v412 = vld [vmem:[#allocation8 + $0xd0] sm:$0xff]
    %v413 = vld [vmem:[#allocation8 + $0xd8] sm:$0xff]
    %v414 = vld [vmem:[#allocation8 + $0xe0] sm:$0xff]
    %v415 = vld [vmem:[#allocation8 + $0xe8] sm:$0xff]
    %v416 = vld [vmem:[#allocation8 + $0xf0] sm:$0xff]
    %v417 = vld [vmem:[#allocation8 + $0xf8] sm:$0xff]
    %v418 = vld [vmem:[#allocation8 + $0x100] sm:$0xff]
    %v419 = vld [vmem:[#allocation8 + $0x108] sm:$0xff]
    %v420 = vld [vmem:[#allocation8 + $0x110] sm:$0xff]
    %v421 = vld [vmem:[#allocation8 + $0x118] sm:$0xff]
    %v422 = vld [vmem:[#allocation8 + $0x120] sm:$0xff]
    %v423 = vld [vmem:[#allocation8 + $0x128] sm:$0xff]
    %v424 = vld [vmem:[#allocation8 + $0x130] sm:$0xff]
    %v425 = vld [vmem:[#allocation8 + $0x138] sm:$0xff]
    %v426 = vld [vmem:[#allocation8 + $0x140] sm:$0xff]
    %v427 = vld [vmem:[#allocation8 + $0x148] sm:$0xff]
    %v428 = vld [vmem:[#allocation8 + $0x150] sm:$0xff]
    %v429 = vld [vmem:[#allocation8 + $0x158] sm:$0xff]
    %v430 = vld [vmem:[#allocation8 + $0x160] sm:$0xff]
    %v431 = vld [vmem:[#allocation8 + $0x168] sm:$0xff]
    %v432 = vld [vmem:[#allocation8 + $0x170] sm:$0xff]
    %v433 = vld [vmem:[#allocation8 + $0x178] sm:$0xff]
    %v434 = vld [vmem:[#allocation8 + $0x180] sm:$0xff]
    %v435 = vld [vmem:[#allocation8 + $0x188] sm:$0xff]
    %v436 = vld [vmem:[#allocation8 + $0x190] sm:$0xff]
    %v437 = vld [vmem:[#allocation8 + $0x198] sm:$0xff]
    %v438 = vld [vmem:[#allocation8 + $0x1a0] sm:$0xff]
    %v439 = vld [vmem:[#allocation8 + $0x1a8] sm:$0xff]
    %v440 = vld [vmem:[#allocation8 + $0x1b0] sm:$0xff]
    %v441 = vld [vmem:[#allocation8 + $0x1b8] sm:$0xff]
    %v442 = vld [vmem:[#allocation8 + $0x1c0] sm:$0xff]
    %v443 = vld [vmem:[#allocation8 + $0x1c8] sm:$0xff]
    %v444 = vld [vmem:[#allocation8 + $0x1d0] sm:$0xff]
    %v445 = vld [vmem:[#allocation8 + $0x1d8] sm:$0xff]
    %v446 = vld [vmem:[#allocation8 + $0x1e0] sm:$0xff]
    %v447 = vld [vmem:[#allocation8 + $0x1e8] sm:$0xff]
    %v448 = vld [vmem:[#allocation8 + $0x1f0] sm:$0xff]
    %v449 = vld [vmem:[#allocation8 + $0x1f8] sm:$0xff]
    %v450 = vld [vmem:[%s4] sm:$0x3]
    %v452 = vperm.slane %v450, 0
    %v453 = vperm.slane %v450, 1
    %v520 = vunpack.c.l.b16 %v386
    %v521 = vunpack.c.h.b16 %v386
    %v522 = vunpack.c.l.b16 %v387
    %v523 = vunpack.c.h.b16 %v387
    %v524 = vunpack.c.l.b16 %v388
    %v525 = vunpack.c.h.b16 %v388
    %v526 = vunpack.c.l.b16 %v389
    %v527 = vunpack.c.h.b16 %v389
    %v528 = vunpack.c.l.b16 %v390
    %v529 = vunpack.c.h.b16 %v390
    %v530 = vunpack.c.l.b16 %v391
    %v531 = vunpack.c.h.b16 %v391
    %v532 = vunpack.c.l.b16 %v392
    %v533 = vunpack.c.h.b16 %v392
    %v534 = vunpack.c.l.b16 %v393
    %v535 = vunpack.c.h.b16 %v393
    %v536 = vunpack.c.l.b16 %v394
    %v537 = vunpack.c.h.b16 %v394
    %v538 = vunpack.c.l.b16 %v395
    %v539 = vunpack.c.h.b16 %v395
    %v540 = vunpack.c.l.b16 %v396
    %v541 = vunpack.c.h.b16 %v396
    %v542 = vunpack.c.l.b16 %v397
    %v543 = vunpack.c.h.b16 %v397
    %v544 = vunpack.c.l.b16 %v398
    %v545 = vunpack.c.h.b16 %v398
    %v546 = vunpack.c.l.b16 %v399
    %v547 = vunpack.c.h.b16 %v399
    %v548 = vunpack.c.l.b16 %v400
    %v549 = vunpack.c.h.b16 %v400
    %v550 = vunpack.c.l.b16 %v401
    %v551 = vunpack.c.h.b16 %v401
    %v552 = vunpack.c.l.b16 %v402
    %v553 = vunpack.c.h.b16 %v402
    %v554 = vunpack.c.l.b16 %v403
    %v555 = vunpack.c.h.b16 %v403
    %v556 = vunpack.c.l.b16 %v404
    %v557 = vunpack.c.h.b16 %v404
    %v558 = vunpack.c.l.b16 %v405
    %v559 = vunpack.c.h.b16 %v405
    %v560 = vunpack.c.l.b16 %v406
    %v561 = vunpack.c.h.b16 %v406
    %v562 = vunpack.c.l.b16 %v407
    %v563 = vunpack.c.h.b16 %v407
    %v564 = vunpack.c.l.b16 %v408
    %v565 = vunpack.c.h.b16 %v408
    %v566 = vunpack.c.l.b16 %v409
    %v567 = vunpack.c.h.b16 %v409
    %v568 = vunpack.c.l.b16 %v410
    %v569 = vunpack.c.h.b16 %v410
    %v570 = vunpack.c.l.b16 %v411
    %v571 = vunpack.c.h.b16 %v411
    %v572 = vunpack.c.l.b16 %v412
    %v573 = vunpack.c.h.b16 %v412
    %v574 = vunpack.c.l.b16 %v413
    %v575 = vunpack.c.h.b16 %v413
    %v576 = vunpack.c.l.b16 %v414
    %v577 = vunpack.c.h.b16 %v414
    %v578 = vunpack.c.l.b16 %v415
    %v579 = vunpack.c.h.b16 %v415
    %v580 = vunpack.c.l.b16 %v416
    %v581 = vunpack.c.h.b16 %v416
    %v582 = vunpack.c.l.b16 %v417
    %v583 = vunpack.c.h.b16 %v417
    %v584 = vunpack.c.l.b16 %v418
    %v585 = vunpack.c.h.b16 %v418
    %v586 = vunpack.c.l.b16 %v419
    %v587 = vunpack.c.h.b16 %v419
    %v588 = vunpack.c.l.b16 %v420
    %v589 = vunpack.c.h.b16 %v420
    %v590 = vunpack.c.l.b16 %v421
    %v591 = vunpack.c.h.b16 %v421
    %v592 = vunpack.c.l.b16 %v422
    %v593 = vunpack.c.h.b16 %v422
    %v594 = vunpack.c.l.b16 %v423
    %v595 = vunpack.c.h.b16 %v423
    %v596 = vunpack.c.l.b16 %v424
    %v597 = vunpack.c.h.b16 %v424
    %v598 = vunpack.c.l.b16 %v425
    %v599 = vunpack.c.h.b16 %v425
    %v600 = vunpack.c.l.b16 %v426
    %v601 = vunpack.c.h.b16 %v426
    %v602 = vunpack.c.l.b16 %v427
    %v603 = vunpack.c.h.b16 %v427
    %v604 = vunpack.c.l.b16 %v428
    %v605 = vunpack.c.h.b16 %v428
    %v606 = vunpack.c.l.b16 %v429
    %v607 = vunpack.c.h.b16 %v429
    %v608 = vunpack.c.l.b16 %v430
    %v609 = vunpack.c.h.b16 %v430
    %v610 = vunpack.c.l.b16 %v431
    %v611 = vunpack.c.h.b16 %v431
    %v612 = vunpack.c.l.b16 %v432
    %v613 = vunpack.c.h.b16 %v432
    %v614 = vunpack.c.l.b16 %v433
    %v615 = vunpack.c.h.b16 %v433
    %v616 = vunpack.c.l.b16 %v434
    %v617 = vunpack.c.h.b16 %v434
    %v618 = vunpack.c.l.b16 %v435
    %v619 = vunpack.c.h.b16 %v435
    %v620 = vunpack.c.l.b16 %v436
    %v621 = vunpack.c.h.b16 %v436
    %v622 = vunpack.c.l.b16 %v437
    %v623 = vunpack.c.h.b16 %v437
    %v624 = vunpack.c.l.b16 %v438
    %v625 = vunpack.c.h.b16 %v438
    %v626 = vunpack.c.l.b16 %v439
    %v627 = vunpack.c.h.b16 %v439
    %v628 = vunpack.c.l.b16 %v440
    %v629 = vunpack.c.h.b16 %v440
    %v630 = vunpack.c.l.b16 %v441
    %v631 = vunpack.c.h.b16 %v441
    %v632 = vunpack.c.l.b16 %v442
    %v633 = vunpack.c.h.b16 %v442
    %v634 = vunpack.c.l.b16 %v443
    %v635 = vunpack.c.h.b16 %v443
    %v636 = vunpack.c.l.b16 %v444
    %v637 = vunpack.c.h.b16 %v444
    %v638 = vunpack.c.l.b16 %v445
    %v639 = vunpack.c.h.b16 %v445
    %v640 = vunpack.c.l.b16 %v446
    %v641 = vunpack.c.h.b16 %v446
    %v642 = vunpack.c.l.b16 %v447
    %v643 = vunpack.c.h.b16 %v447
    %v644 = vunpack.c.l.b16 %v448
    %v645 = vunpack.c.h.b16 %v448
    %v646 = vunpack.c.l.b16 %v449
    %v647 = vunpack.c.h.b16 %v449
    %v648 = vpack.c.b16 %v522, %v520
    %v649 = vpack.c.b16 %v523, %v521
    %v650 = vpack.c.b16 %v526, %v524
    %v651 = vpack.c.b16 %v527, %v525
    %v652 = vpack.c.b16 %v530, %v528
    %v653 = vpack.c.b16 %v531, %v529
    %v654 = vpack.c.b16 %v534, %v532
    %v655 = vpack.c.b16 %v535, %v533
    %v656 = vpack.c.b16 %v538, %v536
    %v657 = vpack.c.b16 %v539, %v537
    %v658 = vpack.c.b16 %v542, %v540
    %v659 = vpack.c.b16 %v543, %v541
    %v660 = vpack.c.b16 %v546, %v544
    %v661 = vpack.c.b16 %v547, %v545
    %v662 = vpack.c.b16 %v550, %v548
    %v663 = vpack.c.b16 %v551, %v549
    %v664 = vpack.c.b16 %v554, %v552
    %v665 = vpack.c.b16 %v555, %v553
    %v666 = vpack.c.b16 %v558, %v556
    %v667 = vpack.c.b16 %v559, %v557
    %v668 = vpack.c.b16 %v562, %v560
    %v669 = vpack.c.b16 %v563, %v561
    %v670 = vpack.c.b16 %v566, %v564
    %v671 = vpack.c.b16 %v567, %v565
    %v672 = vpack.c.b16 %v570, %v568
    %v673 = vpack.c.b16 %v571, %v569
    %v674 = vpack.c.b16 %v574, %v572
    %v675 = vpack.c.b16 %v575, %v573
    %v676 = vpack.c.b16 %v578, %v576
    %v677 = vpack.c.b16 %v579, %v577
    %v678 = vpack.c.b16 %v582, %v580
    %v679 = vpack.c.b16 %v583, %v581
    %v680 = vpack.c.b16 %v586, %v584
    %v681 = vpack.c.b16 %v587, %v585
    %v682 = vpack.c.b16 %v590, %v588
    %v683 = vpack.c.b16 %v591, %v589
    %v684 = vpack.c.b16 %v594, %v592
    %v685 = vpack.c.b16 %v595, %v593
    %v686 = vpack.c.b16 %v598, %v596
    %v687 = vpack.c.b16 %v599, %v597
    %v688 = vpack.c.b16 %v602, %v600
    %v689 = vpack.c.b16 %v603, %v601
    %v690 = vpack.c.b16 %v606, %v604
    %v691 = vpack.c.b16 %v607, %v605
    %v692 = vpack.c.b16 %v610, %v608
    %v693 = vpack.c.b16 %v611, %v609
    %v694 = vpack.c.b16 %v614, %v612
    %v695 = vpack.c.b16 %v615, %v613
    %v696 = vpack.c.b16 %v618, %v616
    %v697 = vpack.c.b16 %v619, %v617
    %v698 = vpack.c.b16 %v622, %v620
    %v699 = vpack.c.b16 %v623, %v621
    %v700 = vpack.c.b16 %v626, %v624
    %v701 = vpack.c.b16 %v627, %v625
    %v702 = vpack.c.b16 %v630, %v628
    %v703 = vpack.c.b16 %v631, %v629
    %v704 = vpack.c.b16 %v634, %v632
    %v705 = vpack.c.b16 %v635, %v633
    %v706 = vpack.c.b16 %v638, %v636
    %v707 = vpack.c.b16 %v639, %v637
    %v708 = vpack.c.b16 %v642, %v640
    %v709 = vpack.c.b16 %v643, %v641
    %v710 = vpack.c.b16 %v646, %v644
    %v711 = vpack.c.b16 %v647, %v645
    %776 = vmatpush.bf16.msra.mxu0 %v662
    %777 = vmatpush.bf16.msra.mxu0 %v660
    %778 = vmatpush.bf16.msra.mxu0 %v658
    %779 = vmatpush.bf16.msra.mxu0 %v656
    %780 = vmatpush.bf16.msra.mxu0 %v654
    %781 = vmatpush.bf16.msra.mxu0 %v652
    %782 = vmatpush.bf16.msra.mxu0 %v650
    %783 = vmatpush.bf16.msra.mxu0 %v648
    %784 = vmatmul.bf16.gmra.mxu0 %v382
    %v785 = vpop.f32.mrf.mxu0
    %v786 = vadd.f32 %v452, %v785
    %v787 = vpop.f32.mrf.mxu0
    %788 = vdwg.mxu0
    %789 = vmatpush.bf16.msra.mxu0 %v678
    %790 = vmatpush.bf16.msra.mxu0 %v676
    %791 = vmatpush.bf16.msra.mxu0 %v674
    %792 = vmatpush.bf16.msra.mxu0 %v672
    %793 = vmatpush.bf16.msra.mxu0 %v670
    %794 = vmatpush.bf16.msra.mxu0 %v668
    %795 = vmatpush.bf16.msra.mxu0 %v666
    %796 = vmatpush.bf16.msra.mxu0 %v664
    %797 = vmatmul.bf16.gmra.mxu0 %v383
    %v798 = vpop.f32.mrf.mxu0
    %v799 = vadd.f32 %v786, %v798
    %v800 = vpop.f32.mrf.mxu0
    %801 = vdwg.mxu0
    %802 = vmatpush.bf16.msra.mxu0 %v694
    %803 = vmatpush.bf16.msra.mxu0 %v692
    %804 = vmatpush.bf16.msra.mxu0 %v690
    %805 = vmatpush.bf16.msra.mxu0 %v688
    %806 = vmatpush.bf16.msra.mxu0 %v686
    %807 = vmatpush.bf16.msra.mxu0 %v684
    %808 = vmatpush.bf16.msra.mxu0 %v682
    %809 = vmatpush.bf16.msra.mxu0 %v680
    %810 = vmatmul.bf16.gmra.mxu0 %v384
    %v811 = vpop.f32.mrf.mxu0
    %v812 = vadd.f32 %v799, %v811
    %v813 = vpop.f32.mrf.mxu0
    %814 = vdwg.mxu0
    %815 = vmatpush.bf16.msra.mxu0 %v710
    %816 = vmatpush.bf16.msra.mxu0 %v708
    %817 = vmatpush.bf16.msra.mxu0 %v706
    %818 = vmatpush.bf16.msra.mxu0 %v704
    %819 = vmatpush.bf16.msra.mxu0 %v702
    %820 = vmatpush.bf16.msra.mxu0 %v700
    %821 = vmatpush.bf16.msra.mxu0 %v698
    %822 = vmatpush.bf16.msra.mxu0 %v696
    %823 = vmatmul.bf16.gmra.mxu0 %v385
    %v824 = vpop.f32.mrf.mxu0
    %v825 = vadd.f32 %v812, %v824
    %v826 = vpop.f32.mrf.mxu0
    %827 = vdwg.mxu0
    %828 = vmatpush.bf16.msra.mxu0 %v663
    %829 = vmatpush.bf16.msra.mxu0 %v661
    %830 = vmatpush.bf16.msra.mxu0 %v659
    %831 = vmatpush.bf16.msra.mxu0 %v657
    %832 = vmatpush.bf16.msra.mxu0 %v655
    %833 = vmatpush.bf16.msra.mxu0 %v653
    %834 = vmatpush.bf16.msra.mxu0 %v651
    %835 = vmatpush.bf16.msra.mxu0 %v649
    %836 = vmatmul.bf16.gmra.mxu0 %v382
    %v837 = vpop.f32.mrf.mxu0
    %v838 = vadd.f32 %v453, %v837
    %v839 = vpop.f32.mrf.mxu0
    %840 = vdwg.mxu0
    %841 = vmatpush.bf16.msra.mxu0 %v679
    %842 = vmatpush.bf16.msra.mxu0 %v677
    %843 = vmatpush.bf16.msra.mxu0 %v675
    %844 = vmatpush.bf16.msra.mxu0 %v673
    %845 = vmatpush.bf16.msra.mxu0 %v671
    %846 = vmatpush.bf16.msra.mxu0 %v669
    %847 = vmatpush.bf16.msra.mxu0 %v667
    %848 = vmatpush.bf16.msra.mxu0 %v665
    %849 = vmatmul.bf16.gmra.mxu0 %v383
    %v850 = vpop.f32.mrf.mxu0
    %v851 = vadd.f32 %v838, %v850
    %v852 = vpop.f32.mrf.mxu0
    %853 = vdwg.mxu0
    %854 = vmatpush.bf16.msra.mxu0 %v695
    %855 = vmatpush.bf16.msra.mxu0 %v693
    %856 = vmatpush.bf16.msra.mxu0 %v691
    %857 = vmatpush.bf16.msra.mxu0 %v689
    %858 = vmatpush.bf16.msra.mxu0 %v687
    %859 = vmatpush.bf16.msra.mxu0 %v685
    %860 = vmatpush.bf16.msra.mxu0 %v683
    %861 = vmatpush.bf16.msra.mxu0 %v681
    %862 = vmatmul.bf16.gmra.mxu0 %v384
    %v863 = vpop.f32.mrf.mxu0
    %v864 = vadd.f32 %v851, %v863
    %v865 = vpop.f32.mrf.mxu0
    %866 = vdwg.mxu0
    %867 = vmatpush.bf16.msra.mxu0 %v711
    %868 = vmatpush.bf16.msra.mxu0 %v709
    %869 = vmatpush.bf16.msra.mxu0 %v707
    %870 = vmatpush.bf16.msra.mxu0 %v705
    %871 = vmatpush.bf16.msra.mxu0 %v703
    %872 = vmatpush.bf16.msra.mxu0 %v701
    %873 = vmatpush.bf16.msra.mxu0 %v699
    %874 = vmatpush.bf16.msra.mxu0 %v697
    %875 = vmatmul.bf16.gmra.mxu0 %v385
    %v876 = vpop.f32.mrf.mxu0
    %v877 = vadd.f32 %v864, %v876
    %v878 = vpop.f32.mrf.mxu0
    %879 = vdwg.mxu0
    %v880 = vmax.f32 %v825, 0.0
    %v881 = vmax.f32 %v877, 0.0
    %v882 = vpack.c.bf16 %v880, %v880
    %v883 = vpack.c.bf16 %v881, %v881
    %v884 = vld [vmem:[#allocation10] sm:$0xf]
    %v885 = vld [vmem:[#allocation10 + $0x4] sm:$0xf]
    %v886 = vld [vmem:[#allocation10 + $0x8] sm:$0xf]
    %v887 = vld [vmem:[#allocation10 + $0xc] sm:$0xf]
    %v888 = vld [vmem:[#allocation10 + $0x10] sm:$0xf]
    %v889 = vld [vmem:[#allocation10 + $0x14] sm:$0xf]
    %v890 = vld [vmem:[#allocation10 + $0x18] sm:$0xf]
    %v891 = vld [vmem:[#allocation10 + $0x1c] sm:$0xf]
    %v892 = vld [vmem:[#allocation10 + $0x20] sm:$0xf]
    %v893 = vld [vmem:[#allocation10 + $0x24] sm:$0xf]
    %v894 = vld [vmem:[#allocation10 + $0x28] sm:$0xf]
    %v895 = vld [vmem:[#allocation10 + $0x2c] sm:$0xf]
    %v896 = vld [vmem:[#allocation10 + $0x30] sm:$0xf]
    %v897 = vld [vmem:[#allocation10 + $0x34] sm:$0xf]
    %v898 = vld [vmem:[#allocation10 + $0x38] sm:$0xf]
    %v899 = vld [vmem:[#allocation10 + $0x3c] sm:$0xf]
    %v900 = vld [vmem:[#allocation10 + $0x40] sm:$0xf]
    %v901 = vld [vmem:[#allocation10 + $0x44] sm:$0xf]
    %v902 = vld [vmem:[#allocation10 + $0x48] sm:$0xf]
    %v903 = vld [vmem:[#allocation10 + $0x4c] sm:$0xf]
    %v904 = vld [vmem:[#allocation10 + $0x50] sm:$0xf]
    %v905 = vld [vmem:[#allocation10 + $0x54] sm:$0xf]
    %v906 = vld [vmem:[#allocation10 + $0x58] sm:$0xf]
    %v907 = vld [vmem:[#allocation10 + $0x5c] sm:$0xf]
    %v908 = vld [vmem:[#allocation10 + $0x60] sm:$0xf]
    %v909 = vld [vmem:[#allocation10 + $0x64] sm:$0xf]
    %v910 = vld [vmem:[#allocation10 + $0x68] sm:$0xf]
    %v911 = vld [vmem:[#allocation10 + $0x6c] sm:$0xf]
    %v912 = vld [vmem:[#allocation10 + $0x70] sm:$0xf]
    %v913 = vld [vmem:[#allocation10 + $0x74] sm:$0xf]
    %v914 = vld [vmem:[#allocation10 + $0x78] sm:$0xf]
    %v915 = vld [vmem:[#allocation10 + $0x7c] sm:$0xf]
    %v916 = vld [vmem:[%s6] sm:$0x1]
    %v918 = vperm.slane %v916, 0
    %v952 = vunpack.c.l.b16 %v884
    %v953 = vunpack.c.l.b16 %v885
    %v954 = vunpack.c.l.b16 %v886
    %v955 = vunpack.c.l.b16 %v887
    %v956 = vunpack.c.l.b16 %v888
    %v957 = vunpack.c.l.b16 %v889
    %v958 = vunpack.c.l.b16 %v890
    %v959 = vunpack.c.l.b16 %v891
    %v960 = vunpack.c.l.b16 %v892
    %v961 = vunpack.c.l.b16 %v893
    %v962 = vunpack.c.l.b16 %v894
    %v963 = vunpack.c.l.b16 %v895
    %v964 = vunpack.c.l.b16 %v896
    %v965 = vunpack.c.l.b16 %v897
    %v966 = vunpack.c.l.b16 %v898
    %v967 = vunpack.c.l.b16 %v899
    %v968 = vunpack.c.l.b16 %v900
    %v969 = vunpack.c.l.b16 %v901
    %v970 = vunpack.c.l.b16 %v902
    %v971 = vunpack.c.l.b16 %v903
    %v972 = vunpack.c.l.b16 %v904
    %v973 = vunpack.c.l.b16 %v905
    %v974 = vunpack.c.l.b16 %v906
    %v975 = vunpack.c.l.b16 %v907
    %v976 = vunpack.c.l.b16 %v908
    %v977 = vunpack.c.l.b16 %v909
    %v978 = vunpack.c.l.b16 %v910
    %v979 = vunpack.c.l.b16 %v911
    %v980 = vunpack.c.l.b16 %v912
    %v981 = vunpack.c.l.b16 %v913
    %v982 = vunpack.c.l.b16 %v914
    %v983 = vunpack.c.l.b16 %v915
    %v984 = vpack.c.b16 %v953, %v952
    %v985 = vpack.c.b16 %v955, %v954
    %v986 = vpack.c.b16 %v957, %v956
    %v987 = vpack.c.b16 %v959, %v958
    %v988 = vpack.c.b16 %v961, %v960
    %v989 = vpack.c.b16 %v963, %v962
    %v990 = vpack.c.b16 %v965, %v964
    %v991 = vpack.c.b16 %v967, %v966
    %v992 = vpack.c.b16 %v969, %v968
    %v993 = vpack.c.b16 %v971, %v970
    %v994 = vpack.c.b16 %v973, %v972
    %v995 = vpack.c.b16 %v975, %v974
    %v996 = vpack.c.b16 %v977, %v976
    %v997 = vpack.c.b16 %v979, %v978
    %v998 = vpack.c.b16 %v981, %v980
    %v999 = vpack.c.b16 %v983, %v982
    %1016 = vmatpush.bf16.msra.mxu0 %v991
    %1017 = vmatpush.bf16.msra.mxu0 %v990
    %1018 = vmatpush.bf16.msra.mxu0 %v989
    %1019 = vmatpush.bf16.msra.mxu0 %v988
    %1020 = vmatpush.bf16.msra.mxu0 %v987
    %1021 = vmatpush.bf16.msra.mxu0 %v986
    %1022 = vmatpush.bf16.msra.mxu0 %v985
    %1023 = vmatpush.bf16.msra.mxu0 %v984
    %1024 = vmatmul.bf16.gmra.mxu0 %v882
    %v1025 = vpop.f32.mrf.mxu0
    %v1026 = vadd.f32 %v918, %v1025
    %v1027 = vpop.f32.mrf.mxu0
    %1028 = vdwg.mxu0
    %1029 = vmatpush.bf16.msra.mxu0 %v999
    %1030 = vmatpush.bf16.msra.mxu0 %v998
    %1031 = vmatpush.bf16.msra.mxu0 %v997
    %1032 = vmatpush.bf16.msra.mxu0 %v996
    %1033 = vmatpush.bf16.msra.mxu0 %v995
    %1034 = vmatpush.bf16.msra.mxu0 %v994
    %1035 = vmatpush.bf16.msra.mxu0 %v993
    %1036 = vmatpush.bf16.msra.mxu0 %v992
    %1037 = vmatmul.bf16.gmra.mxu0 %v883
    %v1038 = vpop.f32.mrf.mxu0
    %v1039 = vadd.f32 %v1026, %v1038
    %v1040 = vpop.f32.mrf.mxu0
    %1041 = vdwg.mxu0
    %v1042 = vmax.f32 %v1039, 0.0
    %v1043 = vpack.c.bf16 %v1042, %v1042
    %v1044 = vld [vmem:[#allocation11] sm:$0xf]
    %v1045 = vld [vmem:[#allocation11 + $0x4] sm:$0xf]
    %v1046 = vld [vmem:[#allocation11 + $0x8] sm:$0xf]
    %v1047 = vld [vmem:[#allocation11 + $0xc] sm:$0xf]
    %v1048 = vld [vmem:[#allocation11 + $0x10] sm:$0xf]
    %v1049 = vld [vmem:[#allocation11 + $0x14] sm:$0xf]
    %v1050 = vld [vmem:[#allocation11 + $0x18] sm:$0xf]
    %v1051 = vld [vmem:[#allocation11 + $0x1c] sm:$0xf]
    %v1052 = vld [vmem:[#allocation11 + $0x20] sm:$0xf]
    %v1053 = vld [vmem:[#allocation11 + $0x24] sm:$0xf]
    %v1054 = vld [vmem:[#allocation11 + $0x28] sm:$0xf]
    %v1055 = vld [vmem:[#allocation11 + $0x2c] sm:$0xf]
    %v1056 = vld [vmem:[#allocation11 + $0x30] sm:$0xf]
    %v1057 = vld [vmem:[#allocation11 + $0x34] sm:$0xf]
    %v1058 = vld [vmem:[#allocation11 + $0x38] sm:$0xf]
    %v1059 = vld [vmem:[#allocation11 + $0x3c] sm:$0xf]
    %v1060 = vld [vmem:[%s8] sm:$0x1]
    %v1062 = vperm.slane %v1060, 0
    %v1080 = vunpack.c.l.b16 %v1044
    %v1081 = vunpack.c.l.b16 %v1045
    %v1082 = vunpack.c.l.b16 %v1046
    %v1083 = vunpack.c.l.b16 %v1047
    %v1084 = vunpack.c.l.b16 %v1048
    %v1085 = vunpack.c.l.b16 %v1049
    %v1086 = vunpack.c.l.b16 %v1050
    %v1087 = vunpack.c.l.b16 %v1051
    %v1088 = vunpack.c.l.b16 %v1052
    %v1089 = vunpack.c.l.b16 %v1053
    %v1090 = vunpack.c.l.b16 %v1054
    %v1091 = vunpack.c.l.b16 %v1055
    %v1092 = vunpack.c.l.b16 %v1056
    %v1093 = vunpack.c.l.b16 %v1057
    %v1094 = vunpack.c.l.b16 %v1058
    %v1095 = vunpack.c.l.b16 %v1059
    %v1096 = vpack.c.b16 %v1081, %v1080
    %v1097 = vpack.c.b16 %v1083, %v1082
    %v1098 = vpack.c.b16 %v1085, %v1084
    %v1099 = vpack.c.b16 %v1087, %v1086
    %v1100 = vpack.c.b16 %v1089, %v1088
    %v1101 = vpack.c.b16 %v1091, %v1090
    %v1102 = vpack.c.b16 %v1093, %v1092
    %v1103 = vpack.c.b16 %v1095, %v1094
    %1112 = vmatpush.bf16.msra.mxu0 %v1103
    %1113 = vmatpush.bf16.msra.mxu0 %v1102
    %1114 = vmatpush.bf16.msra.mxu0 %v1101
    %1115 = vmatpush.bf16.msra.mxu0 %v1100
    %1116 = vmatpush.bf16.msra.mxu0 %v1099
    %1117 = vmatpush.bf16.msra.mxu0 %v1098
    %1118 = vmatpush.bf16.msra.mxu0 %v1097
    %1119 = vmatpush.bf16.msra.mxu0 %v1096
    %1120 = vmatmul.bf16.gmra.mxu0 %v1043
    %v1121 = vpop.f32.mrf.mxu0
    %v1122 = vadd.f32 %v1062, %v1121
    %v1123 = vpop.f32.mrf.mxu0
    %1124 = vdwg.mxu0
    %1125 = vst [vmem:[#allocation13] sm:$0xff] %v1122
    // Predicated region
    $region62: #{tpu_custom_call.1} parent=1 // pred_check
      _
    $region63: #{tpu_custom_call.1} parent=1 // pred_check_branch
      %1127 = sbr.rel (0) target = $region65
    $region64: #{tpu_custom_call.1} parent=1 // pred_region
      %1129 = vsyncadd [#allocation4], 0
      %s1131 = sshll.u32 [#allocation13], 4
      %s1132 = int_to_ptr.vmem [resolvable:$true] %s1131
      %s1133 = sshll.u32 %s9, 4
      %s1134 = int_to_ptr.hbm [resolvable:$true] %s1133
      %1136 = dma.vmem_to_hbm [thread:$0]  %s1132, 128, %s1134, [#allocation4]
    $region65: #{tpu_custom_call.1} parent=1 // pred_fallthru
      _
    // Predicated region
    $region66: #{tpu_custom_call.1} parent=1 // pred_check
      _
    $region67: #{tpu_custom_call.1} parent=1 // pred_check_branch
      %1138 = sbr.rel (0) target = $region69
    $region68: #{tpu_custom_call.1} parent=1 // pred_region
      %1140 = dma.done [#allocation4], 128
    $region69: #{tpu_custom_call.1} parent=1 // pred_fallthru
      _
    %1141 = vsyncpa [#allocation3], 1
    %1142 = vsyncpa [#allocation6], 1
    %1143 = vsyncpa [#allocation9], 1
    %1144 = vsyncpa [#allocation12], 1
    %1145 = vsyncpa [#allocation4], 1

</llo_original>
